<compile_context>
chip_gen: v7x
topology: tpu7x:2x2x1
jax: 0.10.0
libtpu: 0.0.40
codegen_flags: <defaults>
</compile_context>

<pallas_src>
import jax
import jax.numpy as jnp
from jax.experimental import pallas as pl
from jax.experimental.pallas import tpu as pltpu


def _bce_mean_masked_kernel(x_ref, t_ref, m_ref, o_ref):
    """Numerically stable weighted BCE-with-logits, then mean over axis 1.

    PyTorch-stable form: loss = max(x, 0) - x*t + log1p(exp(-|x|)), times mask.
    """
    x = x_ref[...].astype(jnp.float32)
    t = t_ref[...].astype(jnp.float32)
    m = m_ref[...].astype(jnp.float32)
    loss = (jnp.maximum(x, 0.0) - x * t + jnp.log1p(jnp.exp(-jnp.abs(x)))) * m
    o_ref[...] = jnp.sum(loss, axis=1, keepdims=True) * (1.0 / x.shape[1])


def _bce_mean_kernel(x_ref, t_ref, o_ref):
    """Unweighted variant (mask=None): avoids streaming a ones-mask from HBM."""
    x = x_ref[...].astype(jnp.float32)
    t = t_ref[...].astype(jnp.float32)
    loss = jnp.maximum(x, 0.0) - x * t + jnp.log1p(jnp.exp(-jnp.abs(x)))
    o_ref[...] = jnp.sum(loss, axis=1, keepdims=True) * (1.0 / x.shape[1])


_VMEM_TILE_BUDGET = 24 << 20   # double-buffered input footprint target (bytes)
_MIN_BLOCK_BYTES = 1 << 20     # aim for >= ~1 MiB of input per grid step


def _auto_tile_b(B, row_bytes):
    """Pick a batch tile size.

    Goals (mem-bound kernel): amortize the ~0.35us per-grid-step pipeline
    overhead by moving >= ~1 MiB per step; keep 2x-double-buffered VMEM under
    ~24 MiB (fits v7x's 64 MiB physical / 32 MiB scoped VMEM with headroom);
    keep >= 2 grid steps when B allows it so the 'parallel' batch axis can
    shard across v7x's two TensorCores.  tile_b must divide B and be a
    multiple of 8 (or equal B) to satisfy the (8, 128) block constraint.
    """
    max_rows = max(8, _VMEM_TILE_BUDGET // (2 * row_bytes))
    cands = sorted({d for d in range(8, B + 1, 8) if B % d == 0} | {B})
    fitting = [d for d in cands if d <= max_rows]
    tile_b = fitting[-1] if fitting else cands[0]
    if tile_b == B:
        # Prefer >= 2 grid steps (v7x megacore) if each block still moves a
        # useful amount of data.
        smaller = [d for d in cands if d < B and d * row_bytes >= _MIN_BLOCK_BYTES]
        if smaller:
            tile_b = smaller[-1]
    return tile_b


def sigmoid_bce_loss(inputs, target, mask=None, *, tile_b=None):
    """Pallas SigmoidBCELoss.forward: (B, S) inputs/target[/mask] -> (B,) f32."""
    B, S = inputs.shape
    operands = [inputs, target] + ([] if mask is None else [mask])
    row_bytes = S * sum(int(o.dtype.itemsize) for o in operands)

    if tile_b is None:
        tile_b = _auto_tile_b(B, row_bytes)
    assert B % tile_b == 0, "batch must be divisible by tile_b"
    assert tile_b == B or tile_b % 8 == 0, "tile_b must be a multiple of 8 or == B"

    in_spec = pl.BlockSpec((tile_b, S), lambda i: (i, 0))
    out_spec = pl.BlockSpec((tile_b, 1), lambda i: (i, 0))

    cost = pl.CostEstimate(
        flops=10 * B * S,            # max, mul, sub, abs, mask-mul, row-sum, ...
        transcendentals=2 * B * S,   # exp + log1p
        bytes_accessed=B * row_bytes + B * 4,
    )
    # Double-buffered inputs + output + headroom; raise the default scoped
    # VMEM limit (16 MiB v5e / 32 MiB v6e+v7x) if the tile needs it.
    vmem_needed = 2 * tile_b * row_bytes + 2 * tile_b * 4 + (2 << 20)
    params = pltpu.CompilerParams(
        dimension_semantics=("parallel",),
        vmem_limit_bytes=min(64 << 20, max(32 << 20, vmem_needed)),
    )

    kernel = _bce_mean_kernel if mask is None else _bce_mean_masked_kernel
    out = pl.pallas_call(
        kernel,
        out_shape=jax.ShapeDtypeStruct((B, 1), jnp.float32),
        grid_spec=pltpu.PrefetchScalarGridSpec(
            num_scalar_prefetch=0,
            grid=(B // tile_b,),
            in_specs=[in_spec] * len(operands),
            out_specs=out_spec,
        ),
        compiler_params=params,
        cost_estimate=cost,
    )(*operands)
    return out[:, 0]


def _reference(inputs, target, mask):
    # Pure-JAX reference of binary_cross_entropy_with_logits(weight=mask,
    # reduction='none').mean(dim=1).
    x, t, m = inputs, target, mask
    loss = jnp.maximum(x, 0.0) - x * t + jnp.log1p(jnp.exp(-jnp.abs(x)))
    return (loss * m).mean(axis=1)


if __name__ == "__main__":
    key = jax.random.PRNGKey(0)
    k1, k2, k3 = jax.random.split(key, 3)

    B, S = 16, 128  # small word2vec-style shapes (batch, context + negatives)

    inputs = jax.random.normal(k1, (B, S), dtype=jnp.float32) * 2.0
    # 0/1 labels and mask stored as bf16: lossless, 33% less HBM traffic.
    target = (jax.random.uniform(k2, (B, S)) < 0.3).astype(jnp.bfloat16)
    mask = (jax.random.uniform(k3, (B, S)) < 0.8).astype(jnp.bfloat16)

    out = jax.block_until_ready(sigmoid_bce_loss(inputs, target, mask))
    ref = _reference(inputs, target.astype(jnp.float32), mask.astype(jnp.float32))
    assert out.shape == (B,)
    assert jnp.allclose(out, ref, atol=1e-5, rtol=1e-5), (out, ref)

    # mask=None path: uses the 2-input kernel (no ones array streamed).
    out2 = jax.block_until_ready(sigmoid_bce_loss(inputs, target))
    ref2 = _reference(inputs, target.astype(jnp.float32), jnp.ones_like(inputs))
    assert jnp.allclose(out2, ref2, atol=1e-5, rtol=1e-5), (out2, ref2)

    print("KERNEL_OK")
</pallas_src>

<mosaic_0001>
module attributes {stable_mosaic.version = 11 : i64} {
  func.func @_bce_mean_masked_kernel(%arg0: i32, %arg1: memref<16x128xf32, #tpu.memory_space<vmem>>, %arg2: memref<16x128xbf16, #tpu.memory_space<vmem>>, %arg3: memref<16x128xbf16, #tpu.memory_space<vmem>>, %arg4: memref<16x1xf32, #tpu.memory_space<vmem>>) attributes {dimension_semantics = [#tpu.dimension_semantics<parallel>], iteration_bounds = array<i64: 1>, scalar_prefetch = 0 : i64, scratch_operands = 0 : i64, tpu.core_type = #tpu.core_type<tc>, window_params = [{transform_indices = @transform_0, window_bounds = array<i64: 16, 128>}, {transform_indices = @transform_1, window_bounds = array<i64: 16, 128>}, {transform_indices = @transform_2, window_bounds = array<i64: 16, 128>}, {transform_indices = @transform_3, window_bounds = array<i64: 16, 1>}]} {
    %c0 = arith.constant 0 : index
    %c0_0 = arith.constant 0 : index
    %0 = vector.load %arg1[%c0, %c0_0] : memref<16x128xf32, #tpu.memory_space<vmem>>, vector<16x128xf32>
    %c0_1 = arith.constant 0 : index
    %c0_2 = arith.constant 0 : index
    %1 = vector.load %arg2[%c0_1, %c0_2] : memref<16x128xbf16, #tpu.memory_space<vmem>>, vector<16x128xbf16>
    %2 = arith.extf %1 : vector<16x128xbf16> to vector<16x128xf32>
    %c0_3 = arith.constant 0 : index
    %c0_4 = arith.constant 0 : index
    %3 = vector.load %arg3[%c0_3, %c0_4] : memref<16x128xbf16, #tpu.memory_space<vmem>>, vector<16x128xbf16>
    %4 = arith.extf %3 : vector<16x128xbf16> to vector<16x128xf32>
    %cst = arith.constant 0.000000e+00 : f32
    %5 = vector.broadcast %cst : f32 to vector<16x128xf32>
    %6 = arith.maximumf %0, %5 : vector<16x128xf32>
    %7 = arith.mulf %0, %2 : vector<16x128xf32>
    %8 = arith.subf %6, %7 : vector<16x128xf32>
    %9 = math.absf %0 : vector<16x128xf32>
    %cst_5 = arith.constant 0.000000e+00 : f32
    %10 = vector.broadcast %cst_5 : f32 to vector<16x128xf32>
    %11 = arith.subf %10, %9 : vector<16x128xf32>
    %12 = math.exp %11 : vector<16x128xf32>
    %13 = math.log1p %12 : vector<16x128xf32>
    %14 = arith.addf %8, %13 : vector<16x128xf32>
    %15 = arith.mulf %14, %4 : vector<16x128xf32>
    %cst_6 = arith.constant dense<0.000000e+00> : vector<16xf32>
    %16 = vector.multi_reduction <add>, %15, %cst_6 [1] : vector<16x128xf32> to vector<16xf32>
    %17 = vector.shape_cast %16 : vector<16xf32> to vector<16x1xf32>
    %cst_7 = arith.constant 7.812500e-03 : f32
    %18 = vector.broadcast %cst_7 : f32 to vector<16x1xf32>
    %19 = arith.mulf %17, %18 : vector<16x1xf32>
    %c0_8 = arith.constant 0 : index
    %c0_9 = arith.constant 0 : index
    %20 = vector.load %arg4[%c0_8, %c0_9] : memref<16x1xf32, #tpu.memory_space<vmem>>, vector<16x1xf32>
    tpu.vector_store %arg4[%c0_8, %c0_9], %19 {strides = array<i32>} : memref<16x1xf32, #tpu.memory_space<vmem>>, vector<16x1xf32>,
    return
  }
  func.func @transform_0(%arg0: i32) -> (i32, i32) {
    %c0_i32 = arith.constant 0 : i32
    %c0_i32_0 = arith.constant 0 : i32
    return %arg0, %c0_i32 : i32, i32
  }
  func.func @transform_1(%arg0: i32) -> (i32, i32) {
    %c0_i32 = arith.constant 0 : i32
    %c0_i32_0 = arith.constant 0 : i32
    return %arg0, %c0_i32 : i32, i32
  }
  func.func @transform_2(%arg0: i32) -> (i32, i32) {
    %c0_i32 = arith.constant 0 : i32
    %c0_i32_0 = arith.constant 0 : i32
    return %arg0, %c0_i32 : i32, i32
  }
  func.func @transform_3(%arg0: i32) -> (i32, i32) {
    %c0_i32 = arith.constant 0 : i32
    %c0_i32_0 = arith.constant 0 : i32
    return %arg0, %c0_i32 : i32, i32
  }
}

</mosaic_0001>

<llo_original>
// kernel: tpu_custom_call.1
$region0: #{tpu_custom_call.1}
  #allocation0 [shape = 'u32[]', space=smem, size = 0x4, offset = 0x4, fixed_abs, tag = 'smem constant byte address 0x4 - core index']
  #allocation1 [shape = 'u32[144,128]{1,0:T(1,128)}', space=vmem, size = 0x12000, scoped, tag = 'internal scratch']
  %s0 = inlined_call_operand.hbm [shape: f32[16,128], index: 0, kind: input, shape index: {}]
  %s1 = inlined_call_operand.hbm [shape: bf16[16,128], index: 1, kind: input, shape index: {}]
  %s2 = inlined_call_operand.hbm [shape: bf16[16,128], index: 2, kind: input, shape index: {}]
  %s3 = inlined_call_operand.vmem [shape: f32[16,1], index: 3, kind: output, shape index: {}]
  %s4 = sld [smem:[#allocation0]]
  $region34: #{tpu_custom_call.1} parent=0
    _
  %s6 = ssub.s32 1, %s4
  %s7 = scalar_select 0, %s6, %s4
  $region1: #{tpu_custom_call.1} parent=0
    #allocation2 [shape = 'u8[8192]{0}', space=vmem, size = 0x2000, scoped, tag = 'input window, operand 0, single buffered']
    #allocation3 [shape = 's32[1]{0}', space=sflag, size = 0x4, scoped, tag = 'scoped memory for tpu_custom_call.1']
    #allocation4 [shape = 'u8[4096]{0}', space=vmem, size = 0x1000, scoped, tag = 'input window, operand 1, single buffered']
    #allocation5 [shape = 's32[1]{0}', space=sflag, size = 0x4, scoped, tag = 'scoped memory for tpu_custom_call.1']
    #allocation6 [shape = 'u8[4096]{0}', space=vmem, size = 0x1000, scoped, tag = 'input window, operand 2, single buffered']
    %8 = vsyncpa [#allocation3], 0
    %9 = vsyncpa [#allocation5], 0
    // Predicated region
    $region2: #{tpu_custom_call.1} parent=1 // pred_check
      _
    $region3: #{tpu_custom_call.1} parent=1 // pred_check_branch
      %11 = sbr.rel (0) target = $region5
    $region4: #{tpu_custom_call.1} parent=1 // pred_region
      %s13 = ssub.s32 256, 256
      %14 = vsyncadd [#allocation3], %s13
      %s15 = sshll.u32 [#allocation2], 4
      %s16 = int_to_ptr.vmem [resolvable:$true] %s15
      %21 = dma.hbm_to_vmem [thread:$0]  %s0, 256, %s16, [#allocation3], 128, 128, 8
    $region5: #{tpu_custom_call.1} parent=1 // pred_fallthru
      _
    // Predicated region
    $region6: #{tpu_custom_call.1} parent=1 // pred_check
      _
    $region7: #{tpu_custom_call.1} parent=1 // pred_check_branch
      %23 = sbr.rel (0) target = $region9
    $region8: #{tpu_custom_call.1} parent=1 // pred_region
      %s25 = ssub.s32 128, 128
      %26 = vsyncadd [#allocation5], %s25
      %s27 = sshll.u32 [#allocation4], 4
      %s28 = int_to_ptr.vmem [resolvable:$true] %s27
      %33 = dma.hbm_to_vmem [thread:$0]  %s1, 128, %s28, [#allocation5], 64, 64, 4
    $region9: #{tpu_custom_call.1} parent=1 // pred_fallthru
      _
    // Predicated region
    $region10: #{tpu_custom_call.1} parent=1 // pred_check
      _
    $region11: #{tpu_custom_call.1} parent=1 // pred_check_branch
      %35 = sbr.rel (0) target = $region13
    $region12: #{tpu_custom_call.1} parent=1 // pred_region
      %s37 = ssub.s32 128, 128
      %38 = vsyncadd [#allocation5], %s37
      %s39 = sshll.u32 [#allocation6], 4
      %s40 = int_to_ptr.vmem [resolvable:$true] %s39
      %45 = dma.hbm_to_vmem [thread:$0]  %s2, 128, %s40, [#allocation5], 64, 64, 4
    $region13: #{tpu_custom_call.1} parent=1 // pred_fallthru
      _
    // Predicated region
    $region14: #{tpu_custom_call.1} parent=1 // pred_check
      _
    $region15: #{tpu_custom_call.1} parent=1 // pred_check_branch
      %47 = sbr.rel (0) target = $region17
    $region16: #{tpu_custom_call.1} parent=1 // pred_region
      %48 = dma.done [#allocation3], 256
    $region17: #{tpu_custom_call.1} parent=1 // pred_fallthru
      _
    // Predicated region
    $region18: #{tpu_custom_call.1} parent=1 // pred_check
      _
    $region19: #{tpu_custom_call.1} parent=1 // pred_check_branch
      %50 = sbr.rel (0) target = $region21
    $region20: #{tpu_custom_call.1} parent=1 // pred_region
      %51 = dma.done [#allocation5], 128
    $region21: #{tpu_custom_call.1} parent=1 // pred_fallthru
      _
    // Predicated region
    $region22: #{tpu_custom_call.1} parent=1 // pred_check
      _
    $region23: #{tpu_custom_call.1} parent=1 // pred_check_branch
      %53 = sbr.rel (0) target = $region25
    $region24: #{tpu_custom_call.1} parent=1 // pred_region
      %54 = dma.done [#allocation5], 128
    $region25: #{tpu_custom_call.1} parent=1 // pred_fallthru
      _
    %v55 = vld [vmem:[#allocation2] sm:$0xff]
    %v56 = vld [vmem:[#allocation2 + $0x8] sm:$0xff]
    %v57 = vld [vmem:[#allocation4] sm:$0xf]
    %v58 = vld [vmem:[#allocation4 + $0x4] sm:$0xf]
    %v59 = vunpack.c.l.bf16 %v57
    %v60 = vunpack.c.l.bf16 %v58
    %v61 = vld [vmem:[#allocation6] sm:$0xf]
    %v62 = vld [vmem:[#allocation6 + $0x4] sm:$0xf]
    %v63 = vunpack.c.l.bf16 %v61
    %v64 = vunpack.c.l.bf16 %v62
    %v65 = vmax.f32 %v55, 0.0
    %v66 = vmax.f32 %v56, 0.0
    %v67 = vmul.f32 %v55, %v59
    %v68 = vmul.f32 %v56, %v60
    %v69 = vsub.f32 %v65, %v67
    %v70 = vsub.f32 %v66, %v68
    %v71 = vand.u32 2147483647, %v55
    %v72 = vand.u32 2147483647, %v56
    %v73 = vsub.f32 0.0, %v71
    %v74 = vsub.f32 0.0, %v72
    %v75 = vmul.f32 %v73, 1.442695
    %v76 = vpow.pop %v75
    %v77 = vmul.f32 %v74, 1.442695
    %v78 = vpow.pop %v77
    %v79 = vadd.f32 %v76, 1.0
    %v80 = vlog2.pop %v79
    %v81 = vmul.f32 %v80, 0.6931472
    %v82 = vmul.f32 -0.5, %v76
    %v83 = vadd.f32 %v82, 1.0
    %v84 = vmul.f32 %v83, %v76
    %v85 = vand.u32 2147483647, %v76
    %vm86 = vcmp.lt.f32.partialorder %v85, 0.0004427343
    %v87 = vsel %vm86, %v84, %v81
    %v88 = vadd.f32 %v78, 1.0
    %v89 = vlog2.pop %v88
    %v90 = vmul.f32 %v89, 0.6931472
    %v91 = vmul.f32 -0.5, %v78
    %v92 = vadd.f32 %v91, 1.0
    %v93 = vmul.f32 %v92, %v78
    %v94 = vand.u32 2147483647, %v78
    %vm95 = vcmp.lt.f32.partialorder %v94, 0.0004427343
    %v96 = vsel %vm95, %v93, %v90
    %v97 = vadd.f32 %v69, %v87
    %v98 = vadd.f32 %v70, %v96
    %v99 = vmul.f32 %v97, %v63
    %v100 = vmul.f32 %v98, %v64
    %101 = vadd.xlane.f32.xlu0 %v99
    %v102 = vpop.xlane.xlu0 %101
    %103 = vadd.xlane.f32.xlu0 %v100
    %v104 = vpop.xlane.xlu0 %103
    %v105 = vmul.f32 %v102, 0.0078125
    %v106 = vmul.f32 %v104, 0.0078125
    %vm107 = vcmask 7168
    %108 = vst.msk [vmem:[%s3] sm:$0xff] %vm107, %v105
    %109 = vst.msk [vmem:[%s3 + $0x8] sm:$0xff] %vm107, %v106
    // Predicated region
    $region26: #{tpu_custom_call.1} parent=1 // pred_check
      _
    $region27: #{tpu_custom_call.1} parent=1 // pred_check_branch
      %111 = sbr.rel (0) target = $region29
    $region28: #{tpu_custom_call.1} parent=1 // pred_region
      _
    $region29: #{tpu_custom_call.1} parent=1 // pred_fallthru
      _
    // Predicated region
    $region30: #{tpu_custom_call.1} parent=1 // pred_check
      _
    $region31: #{tpu_custom_call.1} parent=1 // pred_check_branch
      %113 = sbr.rel (0) target = $region33
    $region32: #{tpu_custom_call.1} parent=1 // pred_region
      _
    $region33: #{tpu_custom_call.1} parent=1 // pred_fallthru
      _
    %114 = vsyncpa [#allocation3], 1
    %115 = vsyncpa [#allocation5], 1

</llo_original>
